<compile_context>
chip_gen: v7x
topology: tpu7x:2x2x1
jax: 0.10.0
libtpu: 0.0.40
codegen_flags: <defaults>
</compile_context>

<pallas_src>
import jax
import jax.numpy as jnp
from jax.experimental import pallas as pl
from jax.experimental.pallas import tpu as pltpu

# ---------------- config (small synthetic shapes) ----------------
N = 16      # number of nodes
K = 4       # fixed in-degree (kNN-style graph)
D = 32      # in_dim == out_dim (required: residual + Linear(2*out, out))
EPS = 1e-5  # nn.BatchNorm1d default eps


# ---------------- fused kernel ----------------
def fused_kernel(idx_ref, h_ref, w1_ref, b1_ref, w2_ref, b2_ref,
                 wom_ref, wox_ref, bo_ref,
                 wf1_ref, bf1_ref, wf2_ref, bf2_ref,
                 g1_ref, be1_ref, g2_ref, be2_ref, out_ref):
    n = h_ref.shape[0]
    kn = idx_ref.shape[0]
    k_count = kn // n                                  # static Python int

    h = h_ref[...]                                     # [N, D]   destination features

    # --- in-kernel neighbor gather: one-hot selection on the MXU ---
    idx = idx_ref[...]                                 # [K*N, 1] int32, K-major
    col = jax.lax.broadcasted_iota(jnp.int32, (kn, n), 1)
    one_hot = (idx == col).astype(jnp.float32)         # [K*N, N] exact row selector
    hsrc = jnp.dot(one_hot, h, preferred_element_type=jnp.float32)   # [K*N, D]

    # --- EdgeDistancesPassing: dif for all K*N edges, one batched MLP ---
    h_rep = jnp.concatenate([h] * k_count, axis=0)     # [K*N, D] dst features, K-major
    dif = hsrc - h_rep                                 # src - dst

    a = jnp.maximum(
        jnp.dot(dif, w1_ref[...], preferred_element_type=jnp.float32) + b1_ref[...],
        0.0)                                           # [K*N, D]
    s = jnp.sum(a * w2_ref[...], axis=-1, keepdims=True) + b2_ref[0]  # Linear(D, 1)
    s = jnp.maximum(s, 0.0)
    att = 1.0 / (1.0 + jnp.exp(-s))                    # sigmoid
    feat = att * hsrc                                  # [K*N, D]  message 'feature_n'

    # --- MeanMax_aggregation over K (static, sublane-aligned slices) ---
    mean_acc = feat[0:n, :]
    max_acc = feat[0:n, :]
    for kk in range(1, k_count):
        blk = feat[kk * n:(kk + 1) * n, :]
        mean_acc = mean_acc + blk
        max_acc = jnp.maximum(max_acc, blk)
    mean_agg = mean_acc * (1.0 / k_count)

    # O(cat([mean, max], -1)) as two matmuls (avoids a lane concat)
    out = (jnp.dot(mean_agg, wom_ref[...], preferred_element_type=jnp.float32)
           + jnp.dot(max_acc, wox_ref[...], preferred_element_type=jnp.float32)
           + bo_ref[...])
    h1 = h + out                                       # h = h_in + h

    # --- BatchNorm1d (training-mode batch stats) ---
    mu = jnp.mean(h1, axis=0, keepdims=True)
    var = jnp.mean((h1 - mu) ** 2, axis=0, keepdims=True)
    h1n = (h1 - mu) * jax.lax.rsqrt(var + EPS) * g1_ref[...] + be1_ref[...]

    # --- FFN + residual ---
    f = jnp.maximum(
        jnp.dot(h1n, wf1_ref[...], preferred_element_type=jnp.float32) + bf1_ref[...],
        0.0)                                           # [N, 2D]
    f = jnp.dot(f, wf2_ref[...], preferred_element_type=jnp.float32) + bf2_ref[...]
    h2 = h1n + f

    # --- second BatchNorm1d ---
    mu2 = jnp.mean(h2, axis=0, keepdims=True)
    var2 = jnp.mean((h2 - mu2) ** 2, axis=0, keepdims=True)
    out_ref[...] = (h2 - mu2) * jax.lax.rsqrt(var2 + EPS) * g2_ref[...] + be2_ref[...]


# ---------------- wrapper ----------------
def mlp_difs_forward(h, nbr_idx, p):
    n, d = h.shape
    k = nbr_idx.shape[1]

    # K-major flat index column [K*N, 1]: row kk*N + i is the kk-th neighbor of
    # node i.  Only these 4 bytes/edge cross HBM; the gather itself is fused
    # into the kernel (one-hot MXU matmul).
    nbr_flat = nbr_idx.T.reshape(-1, 1).astype(jnp.int32)

    def fs(shape):
        return pl.BlockSpec(shape, lambda i: (0,) * len(shape))

    return pl.pallas_call(
        fused_kernel,
        out_shape=jax.ShapeDtypeStruct((n, d), jnp.float32),
        grid=(1,),   # whole problem (< 100 KB incl. weights) lives in VMEM; one step
        in_specs=[
            fs((k * n, 1)),             # nbr_flat (int32 neighbor ids, K-major)
            fs((n, d)),                 # h (dst features)
            fs((d, d)),                 # W1
            fs((1, d)),                 # b1
            fs((1, d)),                 # w2 (Linear(D,1) weight row)
            pl.BlockSpec(memory_space=pltpu.MemorySpace.SMEM),   # b2 scalar
            fs((d, d)),                 # WO (mean half)
            fs((d, d)),                 # WO (max half)
            fs((1, d)),                 # bO
            fs((d, 2 * d)),             # Wf1
            fs((1, 2 * d)),             # bf1
            fs((2 * d, d)),             # Wf2
            fs((1, d)),                 # bf2
            fs((1, d)), fs((1, d)),     # g1, be1
            fs((1, d)), fs((1, d)),     # g2, be2
        ],
        out_specs=fs((n, d)),
        compiler_params=pltpu.CompilerParams(
            dimension_semantics=("arbitrary",)),
    )(nbr_flat, h, p["W1"], p["b1"], p["w2"], p["b2"], p["WOm"], p["WOx"], p["bO"],
      p["Wf1"], p["bf1"], p["Wf2"], p["bf2"], p["g1"], p["be1"], p["g2"], p["be2"])


# ---------------- pure-JAX reference (for correctness check) ----------------
def reference(h, nbr_idx, p):
    h_src = h[nbr_idx]                              # [N, K, D]
    dif = h_src - h[:, None, :]
    a = jax.nn.relu(dif @ p["W1"] + p["b1"][0])
    s = jax.nn.relu(jnp.sum(a * p["w2"][0], axis=-1, keepdims=True) + p["b2"][0])
    att = jax.nn.sigmoid(s)
    feat = att * h_src
    mean_agg = feat.mean(axis=1)
    max_agg = feat.max(axis=1)
    out = mean_agg @ p["WOm"] + max_agg @ p["WOx"] + p["bO"][0]
    h1 = h + out

    def bn(x, g, b):
        mu = x.mean(0, keepdims=True)
        var = ((x - mu) ** 2).mean(0, keepdims=True)
        return (x - mu) * jax.lax.rsqrt(var + EPS) * g + b

    h1n = bn(h1, p["g1"], p["be1"])
    f = jax.nn.relu(h1n @ p["Wf1"] + p["bf1"][0])
    f = f @ p["Wf2"] + p["bf2"][0]
    h2 = h1n + f
    return bn(h2, p["g2"], p["be2"])


if __name__ == "__main__":
    key = jax.random.PRNGKey(0)
    ks = jax.random.split(key, 16)
    scale = 0.2

    h = jax.random.normal(ks[0], (N, D), dtype=jnp.float32)
    nbr_idx = jax.random.randint(ks[1], (N, K), 0, N)

    params = {
        # EdgeDistancesPassing.MLP : Linear(D, D) -> ReLU -> Linear(D, 1) -> ReLU
        "W1": scale * jax.random.normal(ks[2], (D, D), dtype=jnp.float32),
        "b1": scale * jax.random.normal(ks[3], (1, D), dtype=jnp.float32),
        "w2": scale * jax.random.normal(ks[4], (1, D), dtype=jnp.float32),
        "b2": scale * jax.random.normal(ks[5], (1,), dtype=jnp.float32),
        # MeanMax_aggregation.O : Linear(2D, D), split into mean/max halves
        "WOm": scale * jax.random.normal(ks[6], (D, D), dtype=jnp.float32),
        "WOx": scale * jax.random.normal(ks[7], (D, D), dtype=jnp.float32),
        "bO": scale * jax.random.normal(ks[8], (1, D), dtype=jnp.float32),
        # FFN
        "Wf1": scale * jax.random.normal(ks[9], (D, 2 * D), dtype=jnp.float32),
        "bf1": scale * jax.random.normal(ks[10], (1, 2 * D), dtype=jnp.float32),
        "Wf2": scale * jax.random.normal(ks[11], (2 * D, D), dtype=jnp.float32),
        "bf2": scale * jax.random.normal(ks[12], (1, D), dtype=jnp.float32),
        # BatchNorm affine params (PyTorch defaults: weight=1, bias=0)
        "g1": jnp.ones((1, D), dtype=jnp.float32),
        "be1": jnp.zeros((1, D), dtype=jnp.float32),
        "g2": jnp.ones((1, D), dtype=jnp.float32),
        "be2": jnp.zeros((1, D), dtype=jnp.float32),
    }

    out = jax.jit(mlp_difs_forward)(h, nbr_idx, params)
    out = jax.block_until_ready(out)

    ref = reference(h, nbr_idx, params)
    if not jnp.allclose(out, ref, atol=1e-4, rtol=1e-4):
        raise AssertionError("Pallas kernel output does not match JAX reference")

    print("KERNEL_OK")
</pallas_src>

<mosaic_0001>
module attributes {stable_mosaic.version = 11 : i64} {
  func.func @fused_kernel(%arg0: i32, %arg1: memref<64x1xi32, #tpu.memory_space<vmem>>, %arg2: memref<16x32xf32, #tpu.memory_space<vmem>>, %arg3: memref<32x32xf32, #tpu.memory_space<vmem>>, %arg4: memref<1x32xf32, #tpu.memory_space<vmem>>, %arg5: memref<1x32xf32, #tpu.memory_space<vmem>>, %arg6: memref<1xf32, #tpu.memory_space<smem>>, %arg7: memref<32x32xf32, #tpu.memory_space<vmem>>, %arg8: memref<32x32xf32, #tpu.memory_space<vmem>>, %arg9: memref<1x32xf32, #tpu.memory_space<vmem>>, %arg10: memref<32x64xf32, #tpu.memory_space<vmem>>, %arg11: memref<1x64xf32, #tpu.memory_space<vmem>>, %arg12: memref<64x32xf32, #tpu.memory_space<vmem>>, %arg13: memref<1x32xf32, #tpu.memory_space<vmem>>, %arg14: memref<1x32xf32, #tpu.memory_space<vmem>>, %arg15: memref<1x32xf32, #tpu.memory_space<vmem>>, %arg16: memref<1x32xf32, #tpu.memory_space<vmem>>, %arg17: memref<1x32xf32, #tpu.memory_space<vmem>>, %arg18: memref<16x32xf32, #tpu.memory_space<vmem>>) attributes {dimension_semantics = [#tpu.dimension_semantics<arbitrary>], iteration_bounds = array<i64: 1>, scalar_prefetch = 0 : i64, scratch_operands = 0 : i64, tpu.core_type = #tpu.core_type<tc>, window_params = [{pipeline_mode = #tpu.pipeline_mode<synchronous>, transform_indices = @transform_0, window_bounds = array<i64: 64, 1>}, {pipeline_mode = #tpu.pipeline_mode<synchronous>, transform_indices = @transform_1, window_bounds = array<i64: 16, 32>}, {pipeline_mode = #tpu.pipeline_mode<synchronous>, transform_indices = @transform_2, window_bounds = array<i64: 32, 32>}, {pipeline_mode = #tpu.pipeline_mode<synchronous>, transform_indices = @transform_3, window_bounds = array<i64: 1, 32>}, {pipeline_mode = #tpu.pipeline_mode<synchronous>, transform_indices = @transform_4, window_bounds = array<i64: 1, 32>}, {transform_indices = @transform_5, window_bounds = array<i64: 1>}, {pipeline_mode = #tpu.pipeline_mode<synchronous>, transform_indices = @transform_6, window_bounds = array<i64: 32, 32>}, {pipeline_mode = #tpu.pipeline_mode<synchronous>, transform_indices = @transform_7, window_bounds = array<i64: 32, 32>}, {pipeline_mode = #tpu.pipeline_mode<synchronous>, transform_indices = @transform_8, window_bounds = array<i64: 1, 32>}, {pipeline_mode = #tpu.pipeline_mode<synchronous>, transform_indices = @transform_9, window_bounds = array<i64: 32, 64>}, {pipeline_mode = #tpu.pipeline_mode<synchronous>, transform_indices = @transform_10, window_bounds = array<i64: 1, 64>}, {pipeline_mode = #tpu.pipeline_mode<synchronous>, transform_indices = @transform_11, window_bounds = array<i64: 64, 32>}, {pipeline_mode = #tpu.pipeline_mode<synchronous>, transform_indices = @transform_12, window_bounds = array<i64: 1, 32>}, {pipeline_mode = #tpu.pipeline_mode<synchronous>, transform_indices = @transform_13, window_bounds = array<i64: 1, 32>}, {pipeline_mode = #tpu.pipeline_mode<synchronous>, transform_indices = @transform_14, window_bounds = array<i64: 1, 32>}, {pipeline_mode = #tpu.pipeline_mode<synchronous>, transform_indices = @transform_15, window_bounds = array<i64: 1, 32>}, {pipeline_mode = #tpu.pipeline_mode<synchronous>, transform_indices = @transform_16, window_bounds = array<i64: 1, 32>}, {pipeline_mode = #tpu.pipeline_mode<synchronous>, transform_indices = @transform_17, window_bounds = array<i64: 16, 32>}]} {
    %c0 = arith.constant 0 : index
    %c0_0 = arith.constant 0 : index
    %0 = vector.load %arg2[%c0, %c0_0] : memref<16x32xf32, #tpu.memory_space<vmem>>, vector<16x32xf32>
    %c0_1 = arith.constant 0 : index
    %c0_2 = arith.constant 0 : index
    %1 = vector.load %arg1[%c0_1, %c0_2] : memref<64x1xi32, #tpu.memory_space<vmem>>, vector<64x1xi32>
    %2 = tpu.iota {dimensions = array<i32: 1>} : vector<64x16xi32>
    %3 = vector.broadcast %1 : vector<64x1xi32> to vector<64x16xi32>
    %4 = arith.cmpi eq, %3, %2 : vector<64x16xi32>
    %5 = arith.extui %4 : vector<64x16xi1> to vector<64x16xi32>
    %6 = arith.sitofp %5 : vector<64x16xi32> to vector<64x16xf32>
    %cst = arith.constant dense<0.000000e+00> : vector<64x32xf32>
    %7 = tpu.matmul %6, %0, %cst {dimension_numbers = #tpu.dot_dimension_numbers<[1], [0], [0], [1], [0, 0, 1, 1], [], []>} : vector<64x16xf32>, vector<16x32xf32>, vector<64x32xf32> -> vector<64x32xf32>
    %8 = tpu.concatenate %0, %0, %0, %0 in 0 : vector<16x32xf32>, vector<16x32xf32>, vector<16x32xf32>, vector<16x32xf32> -> vector<64x32xf32>
    %9 = arith.subf %7, %8 : vector<64x32xf32>
    %c0_3 = arith.constant 0 : index
    %c0_4 = arith.constant 0 : index
    %10 = vector.load %arg3[%c0_3, %c0_4] : memref<32x32xf32, #tpu.memory_space<vmem>>, vector<32x32xf32>
    %cst_5 = arith.constant dense<0.000000e+00> : vector<64x32xf32>
    %11 = tpu.matmul %9, %10, %cst_5 {dimension_numbers = #tpu.dot_dimension_numbers<[1], [0], [0], [1], [0, 0, 1, 1], [], []>} : vector<64x32xf32>, vector<32x32xf32>, vector<64x32xf32> -> vector<64x32xf32>
    %c0_6 = arith.constant 0 : index
    %c0_7 = arith.constant 0 : index
    %12 = vector.load %arg4[%c0_6, %c0_7] : memref<1x32xf32, #tpu.memory_space<vmem>>, vector<1x32xf32>
    %13 = vector.broadcast %12 : vector<1x32xf32> to vector<64x32xf32>
    %14 = arith.addf %11, %13 : vector<64x32xf32>
    %cst_8 = arith.constant 0.000000e+00 : f32
    %15 = vector.broadcast %cst_8 : f32 to vector<64x32xf32>
    %16 = arith.maximumf %14, %15 : vector<64x32xf32>
    %c0_9 = arith.constant 0 : index
    %c0_10 = arith.constant 0 : index
    %17 = vector.load %arg5[%c0_9, %c0_10] : memref<1x32xf32, #tpu.memory_space<vmem>>, vector<1x32xf32>
    %18 = vector.broadcast %17 : vector<1x32xf32> to vector<64x32xf32>
    %19 = arith.mulf %16, %18 : vector<64x32xf32>
    %cst_11 = arith.constant dense<0.000000e+00> : vector<64xf32>
    %20 = vector.multi_reduction <add>, %19, %cst_11 [1] : vector<64x32xf32> to vector<64xf32>
    %21 = vector.shape_cast %20 : vector<64xf32> to vector<64x1xf32>
    %c0_12 = arith.constant 0 : index
    %22 = memref.load %arg6[%c0_12] : memref<1xf32, #tpu.memory_space<smem>>
    %23 = vector.broadcast %22 : f32 to vector<64x1xf32>
    %24 = arith.addf %21, %23 : vector<64x1xf32>
    %cst_13 = arith.constant 0.000000e+00 : f32
    %25 = vector.broadcast %cst_13 : f32 to vector<64x1xf32>
    %26 = arith.maximumf %24, %25 : vector<64x1xf32>
    %cst_14 = arith.constant 0.000000e+00 : f32
    %27 = vector.broadcast %cst_14 : f32 to vector<64x1xf32>
    %28 = arith.subf %27, %26 : vector<64x1xf32>
    %29 = math.exp %28 : vector<64x1xf32>
    %cst_15 = arith.constant 1.000000e+00 : f32
    %30 = vector.broadcast %cst_15 : f32 to vector<64x1xf32>
    %31 = arith.addf %30, %29 : vector<64x1xf32>
    %cst_16 = arith.constant 1.000000e+00 : f32
    %32 = vector.broadcast %cst_16 : f32 to vector<64x1xf32>
    %33 = arith.divf %32, %31 : vector<64x1xf32>
    %34 = vector.broadcast %33 : vector<64x1xf32> to vector<64x32xf32>
    %35 = arith.mulf %34, %7 : vector<64x32xf32>
    %36 = vector.extract_strided_slice %35 {offsets = [0, 0], sizes = [16, 32], strides = [1, 1]} : vector<64x32xf32> to vector<16x32xf32>
    %37 = vector.extract_strided_slice %35 {offsets = [0, 0], sizes = [16, 32], strides = [1, 1]} : vector<64x32xf32> to vector<16x32xf32>
    %38 = vector.extract_strided_slice %35 {offsets = [16, 0], sizes = [16, 32], strides = [1, 1]} : vector<64x32xf32> to vector<16x32xf32>
    %39 = arith.addf %36, %38 : vector<16x32xf32>
    %40 = arith.maximumf %37, %38 : vector<16x32xf32>
    %41 = vector.extract_strided_slice %35 {offsets = [32, 0], sizes = [16, 32], strides = [1, 1]} : vector<64x32xf32> to vector<16x32xf32>
    %42 = arith.addf %39, %41 : vector<16x32xf32>
    %43 = arith.maximumf %40, %41 : vector<16x32xf32>
    %44 = vector.extract_strided_slice %35 {offsets = [48, 0], sizes = [16, 32], strides = [1, 1]} : vector<64x32xf32> to vector<16x32xf32>
    %45 = arith.addf %42, %44 : vector<16x32xf32>
    %46 = arith.maximumf %43, %44 : vector<16x32xf32>
    %cst_17 = arith.constant 2.500000e-01 : f32
    %47 = vector.broadcast %cst_17 : f32 to vector<16x32xf32>
    %48 = arith.mulf %45, %47 : vector<16x32xf32>
    %c0_18 = arith.constant 0 : index
    %c0_19 = arith.constant 0 : index
    %49 = vector.load %arg7[%c0_18, %c0_19] : memref<32x32xf32, #tpu.memory_space<vmem>>, vector<32x32xf32>
    %cst_20 = arith.constant dense<0.000000e+00> : vector<16x32xf32>
    %50 = tpu.matmul %48, %49, %cst_20 {dimension_numbers = #tpu.dot_dimension_numbers<[1], [0], [0], [1], [0, 0, 1, 1], [], []>} : vector<16x32xf32>, vector<32x32xf32>, vector<16x32xf32> -> vector<16x32xf32>
    %c0_21 = arith.constant 0 : index
    %c0_22 = arith.constant 0 : index
    %51 = vector.load %arg8[%c0_21, %c0_22] : memref<32x32xf32, #tpu.memory_space<vmem>>, vector<32x32xf32>
    %cst_23 = arith.constant dense<0.000000e+00> : vector<16x32xf32>
    %52 = tpu.matmul %46, %51, %cst_23 {dimension_numbers = #tpu.dot_dimension_numbers<[1], [0], [0], [1], [0, 0, 1, 1], [], []>} : vector<16x32xf32>, vector<32x32xf32>, vector<16x32xf32> -> vector<16x32xf32>
    %53 = arith.addf %50, %52 : vector<16x32xf32>
    %c0_24 = arith.constant 0 : index
    %c0_25 = arith.constant 0 : index
    %54 = vector.load %arg9[%c0_24, %c0_25] : memref<1x32xf32, #tpu.memory_space<vmem>>, vector<1x32xf32>
    %55 = vector.broadcast %54 : vector<1x32xf32> to vector<16x32xf32>
    %56 = arith.addf %53, %55 : vector<16x32xf32>
    %57 = arith.addf %0, %56 : vector<16x32xf32>
    %cst_26 = arith.constant dense<0.000000e+00> : vector<32xf32>
    %58 = vector.multi_reduction <add>, %57, %cst_26 [0] : vector<16x32xf32> to vector<32xf32>
    %59 = vector.shape_cast %58 : vector<32xf32> to vector<1x32xf32>
    %cst_27 = arith.constant 1.600000e+01 : f32
    %60 = vector.broadcast %cst_27 : f32 to vector<1x32xf32>
    %61 = arith.divf %59, %60 : vector<1x32xf32>
    %62 = vector.broadcast %61 : vector<1x32xf32> to vector<16x32xf32>
    %63 = arith.subf %57, %62 : vector<16x32xf32>
    %64 = arith.mulf %63, %63 : vector<16x32xf32>
    %cst_28 = arith.constant dense<0.000000e+00> : vector<32xf32>
    %65 = vector.multi_reduction <add>, %64, %cst_28 [0] : vector<16x32xf32> to vector<32xf32>
    %66 = vector.shape_cast %65 : vector<32xf32> to vector<1x32xf32>
    %cst_29 = arith.constant 1.600000e+01 : f32
    %67 = vector.broadcast %cst_29 : f32 to vector<1x32xf32>
    %68 = arith.divf %66, %67 : vector<1x32xf32>
    %69 = vector.broadcast %61 : vector<1x32xf32> to vector<16x32xf32>
    %70 = arith.subf %57, %69 : vector<16x32xf32>
    %cst_30 = arith.constant 9.99999974E-6 : f32
    %71 = vector.broadcast %cst_30 : f32 to vector<1x32xf32>
    %72 = arith.addf %68, %71 : vector<1x32xf32>
    %73 = math.rsqrt %72 : vector<1x32xf32>
    %74 = vector.broadcast %73 : vector<1x32xf32> to vector<16x32xf32>
    %75 = arith.mulf %70, %74 : vector<16x32xf32>
    %c0_31 = arith.constant 0 : index
    %c0_32 = arith.constant 0 : index
    %76 = vector.load %arg14[%c0_31, %c0_32] : memref<1x32xf32, #tpu.memory_space<vmem>>, vector<1x32xf32>
    %77 = vector.broadcast %76 : vector<1x32xf32> to vector<16x32xf32>
    %78 = arith.mulf %75, %77 : vector<16x32xf32>
    %c0_33 = arith.constant 0 : index
    %c0_34 = arith.constant 0 : index
    %79 = vector.load %arg15[%c0_33, %c0_34] : memref<1x32xf32, #tpu.memory_space<vmem>>, vector<1x32xf32>
    %80 = vector.broadcast %79 : vector<1x32xf32> to vector<16x32xf32>
    %81 = arith.addf %78, %80 : vector<16x32xf32>
    %c0_35 = arith.constant 0 : index
    %c0_36 = arith.constant 0 : index
    %82 = vector.load %arg10[%c0_35, %c0_36] : memref<32x64xf32, #tpu.memory_space<vmem>>, vector<32x64xf32>
    %cst_37 = arith.constant dense<0.000000e+00> : vector<16x64xf32>
    %83 = tpu.matmul %81, %82, %cst_37 {dimension_numbers = #tpu.dot_dimension_numbers<[1], [0], [0], [1], [0, 0, 1, 1], [], []>} : vector<16x32xf32>, vector<32x64xf32>, vector<16x64xf32> -> vector<16x64xf32>
    %c0_38 = arith.constant 0 : index
    %c0_39 = arith.constant 0 : index
    %84 = vector.load %arg11[%c0_38, %c0_39] : memref<1x64xf32, #tpu.memory_space<vmem>>, vector<1x64xf32>
    %85 = vector.broadcast %84 : vector<1x64xf32> to vector<16x64xf32>
    %86 = arith.addf %83, %85 : vector<16x64xf32>
    %cst_40 = arith.constant 0.000000e+00 : f32
    %87 = vector.broadcast %cst_40 : f32 to vector<16x64xf32>
    %88 = arith.maximumf %86, %87 : vector<16x64xf32>
    %c0_41 = arith.constant 0 : index
    %c0_42 = arith.constant 0 : index
    %89 = vector.load %arg12[%c0_41, %c0_42] : memref<64x32xf32, #tpu.memory_space<vmem>>, vector<64x32xf32>
    %cst_43 = arith.constant dense<0.000000e+00> : vector<16x32xf32>
    %90 = tpu.matmul %88, %89, %cst_43 {dimension_numbers = #tpu.dot_dimension_numbers<[1], [0], [0], [1], [0, 0, 1, 1], [], []>} : vector<16x64xf32>, vector<64x32xf32>, vector<16x32xf32> -> vector<16x32xf32>
    %c0_44 = arith.constant 0 : index
    %c0_45 = arith.constant 0 : index
    %91 = vector.load %arg13[%c0_44, %c0_45] : memref<1x32xf32, #tpu.memory_space<vmem>>, vector<1x32xf32>
    %92 = vector.broadcast %91 : vector<1x32xf32> to vector<16x32xf32>
    %93 = arith.addf %90, %92 : vector<16x32xf32>
    %94 = arith.addf %81, %93 : vector<16x32xf32>
    %cst_46 = arith.constant dense<0.000000e+00> : vector<32xf32>
    %95 = vector.multi_reduction <add>, %94, %cst_46 [0] : vector<16x32xf32> to vector<32xf32>
    %96 = vector.shape_cast %95 : vector<32xf32> to vector<1x32xf32>
    %cst_47 = arith.constant 1.600000e+01 : f32
    %97 = vector.broadcast %cst_47 : f32 to vector<1x32xf32>
    %98 = arith.divf %96, %97 : vector<1x32xf32>
    %99 = vector.broadcast %98 : vector<1x32xf32> to vector<16x32xf32>
    %100 = arith.subf %94, %99 : vector<16x32xf32>
    %101 = arith.mulf %100, %100 : vector<16x32xf32>
    %cst_48 = arith.constant dense<0.000000e+00> : vector<32xf32>
    %102 = vector.multi_reduction <add>, %101, %cst_48 [0] : vector<16x32xf32> to vector<32xf32>
    %103 = vector.shape_cast %102 : vector<32xf32> to vector<1x32xf32>
    %cst_49 = arith.constant 1.600000e+01 : f32
    %104 = vector.broadcast %cst_49 : f32 to vector<1x32xf32>
    %105 = arith.divf %103, %104 : vector<1x32xf32>
    %106 = vector.broadcast %98 : vector<1x32xf32> to vector<16x32xf32>
    %107 = arith.subf %94, %106 : vector<16x32xf32>
    %cst_50 = arith.constant 9.99999974E-6 : f32
    %108 = vector.broadcast %cst_50 : f32 to vector<1x32xf32>
    %109 = arith.addf %105, %108 : vector<1x32xf32>
    %110 = math.rsqrt %109 : vector<1x32xf32>
    %111 = vector.broadcast %110 : vector<1x32xf32> to vector<16x32xf32>
    %112 = arith.mulf %107, %111 : vector<16x32xf32>
    %c0_51 = arith.constant 0 : index
    %c0_52 = arith.constant 0 : index
    %113 = vector.load %arg16[%c0_51, %c0_52] : memref<1x32xf32, #tpu.memory_space<vmem>>, vector<1x32xf32>
    %114 = vector.broadcast %113 : vector<1x32xf32> to vector<16x32xf32>
    %115 = arith.mulf %112, %114 : vector<16x32xf32>
    %c0_53 = arith.constant 0 : index
    %c0_54 = arith.constant 0 : index
    %116 = vector.load %arg17[%c0_53, %c0_54] : memref<1x32xf32, #tpu.memory_space<vmem>>, vector<1x32xf32>
    %117 = vector.broadcast %116 : vector<1x32xf32> to vector<16x32xf32>
    %118 = arith.addf %115, %117 : vector<16x32xf32>
    %c0_55 = arith.constant 0 : index
    %c0_56 = arith.constant 0 : index
    %119 = vector.load %arg18[%c0_55, %c0_56] : memref<16x32xf32, #tpu.memory_space<vmem>>, vector<16x32xf32>
    tpu.vector_store %arg18[%c0_55, %c0_56], %118 {strides = array<i32>} : memref<16x32xf32, #tpu.memory_space<vmem>>, vector<16x32xf32>,
    return
  }
  func.func @transform_0(%arg0: i32) -> (i32, i32) {
    %c0_i32 = arith.constant 0 : i32
    %c0_i32_0 = arith.constant 0 : i32
    %c0_i32_1 = arith.constant 0 : i32
    return %c0_i32, %c0_i32_0 : i32, i32
  }
  func.func @transform_1(%arg0: i32) -> (i32, i32) {
    %c0_i32 = arith.constant 0 : i32
    %c0_i32_0 = arith.constant 0 : i32
    %c0_i32_1 = arith.constant 0 : i32
    return %c0_i32, %c0_i32_0 : i32, i32
  }
  func.func @transform_2(%arg0: i32) -> (i32, i32) {
    %c0_i32 = arith.constant 0 : i32
    %c0_i32_0 = arith.constant 0 : i32
    %c0_i32_1 = arith.constant 0 : i32
    return %c0_i32, %c0_i32_0 : i32, i32
  }
  func.func @transform_3(%arg0: i32) -> (i32, i32) {
    %c0_i32 = arith.constant 0 : i32
    %c0_i32_0 = arith.constant 0 : i32
    %c0_i32_1 = arith.constant 0 : i32
    return %c0_i32, %c0_i32_0 : i32, i32
  }
  func.func @transform_4(%arg0: i32) -> (i32, i32) {
    %c0_i32 = arith.constant 0 : i32
    %c0_i32_0 = arith.constant 0 : i32
    %c0_i32_1 = arith.constant 0 : i32
    return %c0_i32, %c0_i32_0 : i32, i32
  }
  func.func @transform_5(%arg0: i32) -> i32 {
    %c0_i32 = arith.constant 0 : i32
    %c0_i32_0 = arith.constant 0 : i32
    return %c0_i32 : i32
  }
  func.func @transform_6(%arg0: i32) -> (i32, i32) {
    %c0_i32 = arith.constant 0 : i32
    %c0_i32_0 = arith.constant 0 : i32
    %c0_i32_1 = arith.constant 0 : i32
    return %c0_i32, %c0_i32_0 : i32, i32
  }
  func.func @transform_7(%arg0: i32) -> (i32, i32) {
    %c0_i32 = arith.constant 0 : i32
    %c0_i32_0 = arith.constant 0 : i32
    %c0_i32_1 = arith.constant 0 : i32
    return %c0_i32, %c0_i32_0 : i32, i32
  }
  func.func @transform_8(%arg0: i32) -> (i32, i32) {
    %c0_i32 = arith.constant 0 : i32
    %c0_i32_0 = arith.constant 0 : i32
    %c0_i32_1 = arith.constant 0 : i32
    return %c0_i32, %c0_i32_0 : i32, i32
  }
  func.func @transform_9(%arg0: i32) -> (i32, i32) {
    %c0_i32 = arith.constant 0 : i32
    %c0_i32_0 = arith.constant 0 : i32
    %c0_i32_1 = arith.constant 0 : i32
    return %c0_i32, %c0_i32_0 : i32, i32
  }
  func.func @transform_10(%arg0: i32) -> (i32, i32) {
    %c0_i32 = arith.constant 0 : i32
    %c0_i32_0 = arith.constant 0 : i32
    %c0_i32_1 = arith.constant 0 : i32
    return %c0_i32, %c0_i32_0 : i32, i32
  }
  func.func @transform_11(%arg0: i32) -> (i32, i32) {
    %c0_i32 = arith.constant 0 : i32
    %c0_i32_0 = arith.constant 0 : i32
    %c0_i32_1 = arith.constant 0 : i32
    return %c0_i32, %c0_i32_0 : i32, i32
  }
  func.func @transform_12(%arg0: i32) -> (i32, i32) {
    %c0_i32 = arith.constant 0 : i32
    %c0_i32_0 = arith.constant 0 : i32
    %c0_i32_1 = arith.constant 0 : i32
    return %c0_i32, %c0_i32_0 : i32, i32
  }
  func.func @transform_13(%arg0: i32) -> (i32, i32) {
    %c0_i32 = arith.constant 0 : i32
    %c0_i32_0 = arith.constant 0 : i32
    %c0_i32_1 = arith.constant 0 : i32
    return %c0_i32, %c0_i32_0 : i32, i32
  }
  func.func @transform_14(%arg0: i32) -> (i32, i32) {
    %c0_i32 = arith.constant 0 : i32
    %c0_i32_0 = arith.constant 0 : i32
    %c0_i32_1 = arith.constant 0 : i32
    return %c0_i32, %c0_i32_0 : i32, i32
  }
  func.func @transform_15(%arg0: i32) -> (i32, i32) {
    %c0_i32 = arith.constant 0 : i32
    %c0_i32_0 = arith.constant 0 : i32
    %c0_i32_1 = arith.constant 0 : i32
    return %c0_i32, %c0_i32_0 : i32, i32
  }
  func.func @transform_16(%arg0: i32) -> (i32, i32) {
    %c0_i32 = arith.constant 0 : i32
    %c0_i32_0 = arith.constant 0 : i32
    %c0_i32_1 = arith.constant 0 : i32
    return %c0_i32, %c0_i32_0 : i32, i32
  }
  func.func @transform_17(%arg0: i32) -> (i32, i32) {
    %c0_i32 = arith.constant 0 : i32
    %c0_i32_0 = arith.constant 0 : i32
    %c0_i32_1 = arith.constant 0 : i32
    return %c0_i32, %c0_i32_0 : i32, i32
  }
}

</mosaic_0001>

<llo_original>
// kernel: mlp_difs_forward.1
$region0: #{mlp_difs_forward.1}
  #allocation0 [shape = 'u32[]', space=smem, size = 0x4, offset = 0x4, fixed_abs, tag = 'smem constant byte address 0x4 - core index']
  #allocation1 [shape = 'u32[144,128]{1,0:T(1,128)}', space=vmem, size = 0x12000, scoped, tag = 'internal scratch']
  #allocation2 [shape = 'f32[1]{0:T(128)S(6)}', space=smem, size = 0x200, scoped, tag = 'scoped memory for mlp_difs_forward.1']
  %s0 = inlined_call_operand.vmem [shape: s32[64,1], index: 0, kind: input, shape index: {}]
  %s1 = inlined_call_operand.hbm [shape: f32[16,32], index: 1, kind: input, shape index: {}]
  %s2 = inlined_call_operand.vmem [shape: f32[32,32], index: 2, kind: input, shape index: {}]
  %s3 = inlined_call_operand.vmem [shape: f32[1,32], index: 3, kind: input, shape index: {}]
  %s4 = inlined_call_operand.vmem [shape: f32[1,32], index: 4, kind: input, shape index: {}]
  %s5 = inlined_call_operand.<no memory space> [shape: f32[1], index: 5, kind: input, shape index: {}]
  %s6 = inlined_call_operand.vmem [shape: f32[32,32], index: 6, kind: input, shape index: {}]
  %s7 = inlined_call_operand.vmem [shape: f32[32,32], index: 7, kind: input, shape index: {}]
  %s8 = inlined_call_operand.vmem [shape: f32[1,32], index: 8, kind: input, shape index: {}]
  %s9 = inlined_call_operand.vmem [shape: f32[32,64], index: 9, kind: input, shape index: {}]
  %s10 = inlined_call_operand.vmem [shape: f32[1,64], index: 10, kind: input, shape index: {}]
  %s11 = inlined_call_operand.vmem [shape: f32[64,32], index: 11, kind: input, shape index: {}]
  %s12 = inlined_call_operand.vmem [shape: f32[1,32], index: 12, kind: input, shape index: {}]
  %s13 = inlined_call_operand.vmem [shape: f32[1,32], index: 13, kind: input, shape index: {}]
  %s14 = inlined_call_operand.vmem [shape: f32[1,32], index: 14, kind: input, shape index: {}]
  %s15 = inlined_call_operand.vmem [shape: f32[1,32], index: 15, kind: input, shape index: {}]
  %s16 = inlined_call_operand.vmem [shape: f32[1,32], index: 16, kind: input, shape index: {}]
  %s17 = inlined_call_operand.hbm [shape: f32[16,32], index: 17, kind: output, shape index: {}]
  %s18 = sld [smem:[#allocation0]]
  $region82: #{mlp_difs_forward.1} parent=0
    _
  %s20 = ssub.s32 1, %s18
  %s21 = scalar_select 0, %s20, %s18
  %22 = sst [smem:[#allocation2]] %s5
  $region1: #{mlp_difs_forward.1} parent=0
    #allocation3 [shape = 'u8[8192]{0}', space=vmem, size = 0x2000, scoped, tag = 'input window, operand 1, single buffered']
    #allocation4 [shape = 's32[1]{0}', space=sflag, size = 0x4, scoped, tag = 'scoped memory for mlp_difs_forward.1']
    #allocation5 [shape = 's32[1]{0}', space=sflag, size = 0x4, scoped, tag = 'scoped memory for mlp_difs_forward.1']
    #allocation6 [shape = 'u8[8192]{0}', space=vmem, size = 0x2000, scoped, tag = 'output window, operand 0, single buffered']
    %23 = vsyncpa [#allocation4], 0
    %24 = vsyncpa [#allocation5], 0
    // Predicated region
    $region2: #{mlp_difs_forward.1} parent=1 // pred_check
      _
    $region3: #{mlp_difs_forward.1} parent=1 // pred_check_branch
      %26 = sbr.rel (0) target = $region5
    $region4: #{mlp_difs_forward.1} parent=1 // pred_region
      _
    $region5: #{mlp_difs_forward.1} parent=1 // pred_fallthru
      _
    // Predicated region
    $region6: #{mlp_difs_forward.1} parent=1 // pred_check
      _
    $region7: #{mlp_difs_forward.1} parent=1 // pred_check_branch
      %28 = sbr.rel (0) target = $region9
    $region8: #{mlp_difs_forward.1} parent=1 // pred_region
      %s30 = ssub.s32 256, 256
      %31 = vsyncadd [#allocation4], %s30
      %s32 = sshll.u32 [#allocation3], 4
      %s33 = int_to_ptr.vmem [resolvable:$true] %s32
      %38 = dma.hbm_to_vmem [thread:$0]  %s1, 256, %s33, [#allocation4], 128, 128, 8
    $region9: #{mlp_difs_forward.1} parent=1 // pred_fallthru
      _
    // Predicated region
    $region10: #{mlp_difs_forward.1} parent=1 // pred_check
      _
    $region11: #{mlp_difs_forward.1} parent=1 // pred_check_branch
      %40 = sbr.rel (0) target = $region13
    $region12: #{mlp_difs_forward.1} parent=1 // pred_region
      _
    $region13: #{mlp_difs_forward.1} parent=1 // pred_fallthru
      _
    // Predicated region
    $region14: #{mlp_difs_forward.1} parent=1 // pred_check
      _
    $region15: #{mlp_difs_forward.1} parent=1 // pred_check_branch
      %42 = sbr.rel (0) target = $region17
    $region16: #{mlp_difs_forward.1} parent=1 // pred_region
      _
    $region17: #{mlp_difs_forward.1} parent=1 // pred_fallthru
      _
    // Predicated region
    $region18: #{mlp_difs_forward.1} parent=1 // pred_check
      _
    $region19: #{mlp_difs_forward.1} parent=1 // pred_check_branch
      %44 = sbr.rel (0) target = $region21
    $region20: #{mlp_difs_forward.1} parent=1 // pred_region
      _
    $region21: #{mlp_difs_forward.1} parent=1 // pred_fallthru
      _
    // Predicated region
    $region22: #{mlp_difs_forward.1} parent=1 // pred_check
      _
    $region23: #{mlp_difs_forward.1} parent=1 // pred_check_branch
      %46 = sbr.rel (0) target = $region25
    $region24: #{mlp_difs_forward.1} parent=1 // pred_region
      _
    $region25: #{mlp_difs_forward.1} parent=1 // pred_fallthru
      _
    // Predicated region
    $region26: #{mlp_difs_forward.1} parent=1 // pred_check
      _
    $region27: #{mlp_difs_forward.1} parent=1 // pred_check_branch
      %48 = sbr.rel (0) target = $region29
    $region28: #{mlp_difs_forward.1} parent=1 // pred_region
      _
    $region29: #{mlp_difs_forward.1} parent=1 // pred_fallthru
      _
    // Predicated region
    $region30: #{mlp_difs_forward.1} parent=1 // pred_check
      _
    $region31: #{mlp_difs_forward.1} parent=1 // pred_check_branch
      %50 = sbr.rel (0) target = $region33
    $region32: #{mlp_difs_forward.1} parent=1 // pred_region
      _
    $region33: #{mlp_difs_forward.1} parent=1 // pred_fallthru
      _
    // Predicated region
    $region34: #{mlp_difs_forward.1} parent=1 // pred_check
      _
    $region35: #{mlp_difs_forward.1} parent=1 // pred_check_branch
      %52 = sbr.rel (0) target = $region37
    $region36: #{mlp_difs_forward.1} parent=1 // pred_region
      _
    $region37: #{mlp_difs_forward.1} parent=1 // pred_fallthru
      _
    // Predicated region
    $region38: #{mlp_difs_forward.1} parent=1 // pred_check
      _
    $region39: #{mlp_difs_forward.1} parent=1 // pred_check_branch
      %54 = sbr.rel (0) target = $region41
    $region40: #{mlp_difs_forward.1} parent=1 // pred_region
      _
    $region41: #{mlp_difs_forward.1} parent=1 // pred_fallthru
      _
    // Predicated region
    $region42: #{mlp_difs_forward.1} parent=1 // pred_check
      _
    $region43: #{mlp_difs_forward.1} parent=1 // pred_check_branch
      %56 = sbr.rel (0) target = $region45
    $region44: #{mlp_difs_forward.1} parent=1 // pred_region
      _
    $region45: #{mlp_difs_forward.1} parent=1 // pred_fallthru
      _
    // Predicated region
    $region46: #{mlp_difs_forward.1} parent=1 // pred_check
      _
    $region47: #{mlp_difs_forward.1} parent=1 // pred_check_branch
      %58 = sbr.rel (0) target = $region49
    $region48: #{mlp_difs_forward.1} parent=1 // pred_region
      _
    $region49: #{mlp_difs_forward.1} parent=1 // pred_fallthru
      _
    // Predicated region
    $region50: #{mlp_difs_forward.1} parent=1 // pred_check
      _
    $region51: #{mlp_difs_forward.1} parent=1 // pred_check_branch
      %60 = sbr.rel (0) target = $region53
    $region52: #{mlp_difs_forward.1} parent=1 // pred_region
      _
    $region53: #{mlp_difs_forward.1} parent=1 // pred_fallthru
      _
    // Predicated region
    $region54: #{mlp_difs_forward.1} parent=1 // pred_check
      _
    $region55: #{mlp_difs_forward.1} parent=1 // pred_check_branch
      %62 = sbr.rel (0) target = $region57
    $region56: #{mlp_difs_forward.1} parent=1 // pred_region
      _
    $region57: #{mlp_difs_forward.1} parent=1 // pred_fallthru
      _
    // Predicated region
    $region58: #{mlp_difs_forward.1} parent=1 // pred_check
      _
    $region59: #{mlp_difs_forward.1} parent=1 // pred_check_branch
      %64 = sbr.rel (0) target = $region61
    $region60: #{mlp_difs_forward.1} parent=1 // pred_region
      _
    $region61: #{mlp_difs_forward.1} parent=1 // pred_fallthru
      _
    // Predicated region
    $region62: #{mlp_difs_forward.1} parent=1 // pred_check
      _
    $region63: #{mlp_difs_forward.1} parent=1 // pred_check_branch
      %66 = sbr.rel (0) target = $region65
    $region64: #{mlp_difs_forward.1} parent=1 // pred_region
      _
    $region65: #{mlp_difs_forward.1} parent=1 // pred_fallthru
      _
    // Predicated region
    $region66: #{mlp_difs_forward.1} parent=1 // pred_check
      _
    $region67: #{mlp_difs_forward.1} parent=1 // pred_check_branch
      %68 = sbr.rel (0) target = $region69
    $region68: #{mlp_difs_forward.1} parent=1 // pred_region
      _
    $region69: #{mlp_difs_forward.1} parent=1 // pred_fallthru
      _
    // Predicated region
    $region70: #{mlp_difs_forward.1} parent=1 // pred_check
      _
    $region71: #{mlp_difs_forward.1} parent=1 // pred_check_branch
      %70 = sbr.rel (0) target = $region73
    $region72: #{mlp_difs_forward.1} parent=1 // pred_region
      %71 = dma.done [#allocation4], 256
    $region73: #{mlp_difs_forward.1} parent=1 // pred_fallthru
      _
    %v72 = vld [vmem:[#allocation3] sm:$0xff]
    %v73 = vld [vmem:[#allocation3 + $0x8] sm:$0xff]
    %v74 = vld [vmem:[%s0] sm:$0xff]
    %v75 = vld [vmem:[%s0 + $0x8] sm:$0xff]
    %v76 = vld [vmem:[%s0 + $0x10] sm:$0xff]
    %v77 = vld [vmem:[%s0 + $0x18] sm:$0xff]
    %v78 = vld [vmem:[%s0 + $0x20] sm:$0xff]
    %v79 = vld [vmem:[%s0 + $0x28] sm:$0xff]
    %v80 = vld [vmem:[%s0 + $0x30] sm:$0xff]
    %v81 = vld [vmem:[%s0 + $0x38] sm:$0xff]
    %v82 = vlaneseq
    %v83 = vand.u32 %v82, 127
    %84 = vset.pattern.permute.xlu0 0
    %85 = vperm.xlu0 %84, %v74
    %v86 = vpop.permute.xlu0 %85
    %87 = vset.pattern.permute.xlu0 0
    %88 = vperm.xlu0 %87, %v75
    %v89 = vpop.permute.xlu0 %88
    %90 = vset.pattern.permute.xlu0 0
    %91 = vperm.xlu0 %90, %v76
    %v92 = vpop.permute.xlu0 %91
    %93 = vset.pattern.permute.xlu0 0
    %94 = vperm.xlu0 %93, %v77
    %v95 = vpop.permute.xlu0 %94
    %96 = vset.pattern.permute.xlu0 0
    %97 = vperm.xlu0 %96, %v78
    %v98 = vpop.permute.xlu0 %97
    %99 = vset.pattern.permute.xlu0 0
    %100 = vperm.xlu0 %99, %v79
    %v101 = vpop.permute.xlu0 %100
    %102 = vset.pattern.permute.xlu0 0
    %103 = vperm.xlu0 %102, %v80
    %v104 = vpop.permute.xlu0 %103
    %105 = vset.pattern.permute.xlu0 0
    %106 = vperm.xlu0 %105, %v81
    %v107 = vpop.permute.xlu0 %106
    %vm108 = vcmp.eq.s32.totalorder %v86, %v83
    %vm109 = vcmp.eq.s32.totalorder %v89, %v83
    %vm110 = vcmp.eq.s32.totalorder %v92, %v83
    %vm111 = vcmp.eq.s32.totalorder %v95, %v83
    %vm112 = vcmp.eq.s32.totalorder %v98, %v83
    %vm113 = vcmp.eq.s32.totalorder %v101, %v83
    %vm114 = vcmp.eq.s32.totalorder %v104, %v83
    %vm115 = vcmp.eq.s32.totalorder %v107, %v83
    %v116 = vsel %vm108, 1, 0
    %v117 = vsel %vm109, 1, 0
    %v118 = vsel %vm110, 1, 0
    %v119 = vsel %vm111, 1, 0
    %v120 = vsel %vm112, 1, 0
    %v121 = vsel %vm113, 1, 0
    %v122 = vsel %vm114, 1, 0
    %v123 = vsel %vm115, 1, 0
    %v124 = vcvt.s32.f32 %v116
    %v125 = vcvt.s32.f32 %v117
    %v126 = vcvt.s32.f32 %v118
    %v127 = vcvt.s32.f32 %v119
    %v128 = vcvt.s32.f32 %v120
    %v129 = vcvt.s32.f32 %v121
    %v130 = vcvt.s32.f32 %v122
    %v131 = vcvt.s32.f32 %v123
    %vm132 = vcmask 130048
    %v134 = vsel %vm132, %v124, 0
    %v137 = vsel %vm132, %v125, 0
    %v140 = vsel %vm132, %v126, 0
    %v143 = vsel %vm132, %v127, 0
    %v146 = vsel %vm132, %v128, 0
    %v149 = vsel %vm132, %v129, 0
    %v152 = vsel %vm132, %v130, 0
    %v155 = vsel %vm132, %v131, 0
    %157 = vmatprep.subr.mxu0 0.0
    %158 = vmatpush1.msra.mxu0 %v72
    %159 = vmatprep.subr.mxu0 0.0
    %160 = vmatpush1.msra.mxu0 %v73
    %161 = vmatprep.subr.mxu0 0.0
    %162 = vmatpush1.msra.mxu0 0.0
    %163 = vmatprep.subr.mxu0 0.0
    %164 = vmatpush1.msra.mxu0 0.0
    %165 = vmatprep.subr.mxu0 0.0
    %166 = vmatpush1.msra.mxu0 0.0
    %167 = vmatprep.subr.mxu0 0.0
    %168 = vmatpush1.msra.mxu0 0.0
    %169 = vmatprep.subr.mxu0 0.0
    %170 = vmatpush1.msra.mxu0 0.0
    %171 = vmatprep.subr.mxu0 0.0
    %172 = vmatpush1.msra.mxu0 0.0
    %173 = vmatprep.subr.mxu0 0.0
    %174 = vmatpush1.msra.mxu0 0.0
    %175 = vmatprep.subr.mxu0 0.0
    %176 = vmatpush1.msra.mxu0 0.0
    %177 = vmatprep.subr.mxu0 0.0
    %178 = vmatpush1.msra.mxu0 0.0
    %179 = vmatprep.subr.mxu0 0.0
    %180 = vmatpush1.msra.mxu0 0.0
    %181 = vmatprep.subr.mxu0 0.0
    %182 = vmatpush1.msra.mxu0 0.0
    %183 = vmatprep.subr.mxu0 0.0
    %184 = vmatpush1.msra.mxu0 0.0
    %185 = vmatprep.subr.mxu0 0.0
    %186 = vmatpush1.msra.mxu0 0.0
    %187 = vmatprep.subr.mxu0 0.0
    %188 = vmatpush1.msra.mxu0 0.0
    %189 = vmatprep.subr.mxu0 0.0
    %190 = vmatpush1.msra.mxu0 0.0
    %191 = vmatprep.subr.mxu0 0.0
    %192 = vmatpush1.msra.mxu0 0.0
    %193 = vmatprep.subr.mxu0 0.0
    %194 = vmatpush1.msra.mxu0 0.0
    %195 = vmatprep.subr.mxu0 0.0
    %196 = vmatpush1.msra.mxu0 0.0
    %197 = vmatprep.subr.mxu0 0.0
    %198 = vmatpush1.msra.mxu0 0.0
    %199 = vmatprep.subr.mxu0 0.0
    %200 = vmatpush1.msra.mxu0 0.0
    %201 = vmatprep.subr.mxu0 0.0
    %202 = vmatpush1.msra.mxu0 0.0
    %203 = vmatprep.subr.mxu0 0.0
    %204 = vmatpush1.msra.mxu0 0.0
    %205 = vmatprep.subr.mxu0 0.0
    %206 = vmatpush1.msra.mxu0 0.0
    %207 = vmatprep.subr.mxu0 0.0
    %208 = vmatpush1.msra.mxu0 0.0
    %209 = vmatprep.subr.mxu0 0.0
    %210 = vmatpush1.msra.mxu0 0.0
    %211 = vmatprep.subr.mxu0 0.0
    %212 = vmatpush1.msra.mxu0 0.0
    %213 = vmatprep.subr.mxu0 0.0
    %214 = vmatpush1.msra.mxu0 0.0
    %215 = vmatprep.subr.mxu0 0.0
    %216 = vmatpush1.msra.mxu0 0.0
    %217 = vmatprep.subr.mxu0 0.0
    %218 = vmatpush1.msra.mxu0 0.0
    %219 = vmatprep.subr.mxu0 0.0
    %220 = vmatpush1.msra.mxu0 0.0
    %221 = vmatprep.mubr.f32.mxu0 0.0
    %222 = vmatmul.mubr.f32.gmra.mrb[0].mxu0 %v134
    %v223 = vpop.f32.mrb[0].mxu0
    %v224 = vadd.f32 0.0, %v223
    %v225 = vpop.f32.mrb[0].mxu0
    %226 = vmatprep.mubr.f32.mxu0 0.0
    %227 = vmatmul.mubr.f32.gmra.mrb[0].mxu0 %v137
    %v228 = vpop.f32.mrb[0].mxu0
    %v229 = vadd.f32 0.0, %v228
    %v230 = vpop.f32.mrb[0].mxu0
    %231 = vmatprep.mubr.f32.mxu0 0.0
    %232 = vmatmul.mubr.f32.gmra.mrb[0].mxu0 %v140
    %v233 = vpop.f32.mrb[0].mxu0
    %v234 = vadd.f32 0.0, %v233
    %v235 = vpop.f32.mrb[0].mxu0
    %236 = vmatprep.mubr.f32.mxu0 0.0
    %237 = vmatmul.mubr.f32.gmra.mrb[0].mxu0 %v143
    %v238 = vpop.f32.mrb[0].mxu0
    %v239 = vadd.f32 0.0, %v238
    %v240 = vpop.f32.mrb[0].mxu0
    %241 = vmatprep.mubr.f32.mxu0 0.0
    %242 = vmatmul.mubr.f32.gmra.mrb[0].mxu0 %v146
    %v243 = vpop.f32.mrb[0].mxu0
    %v244 = vadd.f32 0.0, %v243
    %v245 = vpop.f32.mrb[0].mxu0
    %246 = vmatprep.mubr.f32.mxu0 0.0
    %247 = vmatmul.mubr.f32.gmra.mrb[0].mxu0 %v149
    %v248 = vpop.f32.mrb[0].mxu0
    %v249 = vadd.f32 0.0, %v248
    %v250 = vpop.f32.mrb[0].mxu0
    %251 = vmatprep.mubr.f32.mxu0 0.0
    %252 = vmatmul.mubr.f32.gmra.mrb[0].mxu0 %v152
    %v253 = vpop.f32.mrb[0].mxu0
    %v254 = vadd.f32 0.0, %v253
    %v255 = vpop.f32.mrb[0].mxu0
    %256 = vmatprep.mubr.f32.mxu0 0.0
    %257 = vmatmul.mubr.f32.gmra.mrb[0].mxu0 %v155
    %v258 = vpop.f32.mrb[0].mxu0
    %v259 = vadd.f32 0.0, %v258
    %v260 = vpop.f32.mrb[0].mxu0
    %261 = vdwg.mxu0
    %v262 = vsub.f32 %v224, %v72
    %v263 = vsub.f32 %v229, %v73
    %v264 = vsub.f32 %v234, %v72
    %v265 = vsub.f32 %v239, %v73
    %v266 = vsub.f32 %v244, %v72
    %v267 = vsub.f32 %v249, %v73
    %v268 = vsub.f32 %v254, %v72
    %v269 = vsub.f32 %v259, %v73
    %v270 = vld [vmem:[%s2] sm:$0xff]
    %v271 = vld [vmem:[%s2 + $0x8] sm:$0xff]
    %v272 = vld [vmem:[%s2 + $0x10] sm:$0xff]
    %v273 = vld [vmem:[%s2 + $0x18] sm:$0xff]
    %v274 = vld [vmem:[%s3] sm:$0x1]
    %v276 = vlaneseq
    %v277 = vshrl.u32 %v276, 7
    %v278 = vsub.s32 0, %v277
    %v279 = vrot.slane %v274, %v278
    %vm281 = vcmask 261120
    %v283 = vsel %vm281, %v262, 0
    %v286 = vsel %vm281, %v263, 0
    %v289 = vsel %vm281, %v264, 0
    %v292 = vsel %vm281, %v265, 0
    %v295 = vsel %vm281, %v266, 0
    %v298 = vsel %vm281, %v267, 0
    %v301 = vsel %vm281, %v268, 0
    %v304 = vsel %vm281, %v269, 0
    %306 = vmatprep.subr.mxu0 0.0
    %307 = vmatpush1.msra.mxu0 %v270
    %308 = vmatprep.subr.mxu0 0.0
    %309 = vmatpush1.msra.mxu0 %v271
    %310 = vmatprep.subr.mxu0 0.0
    %311 = vmatpush1.msra.mxu0 %v272
    %312 = vmatprep.subr.mxu0 0.0
    %313 = vmatpush1.msra.mxu0 %v273
    %314 = vmatprep.subr.mxu0 0.0
    %315 = vmatpush1.msra.mxu0 0.0
    %316 = vmatprep.subr.mxu0 0.0
    %317 = vmatpush1.msra.mxu0 0.0
    %318 = vmatprep.subr.mxu0 0.0
    %319 = vmatpush1.msra.mxu0 0.0
    %320 = vmatprep.subr.mxu0 0.0
    %321 = vmatpush1.msra.mxu0 0.0
    %322 = vmatprep.subr.mxu0 0.0
    %323 = vmatpush1.msra.mxu0 0.0
    %324 = vmatprep.subr.mxu0 0.0
    %325 = vmatpush1.msra.mxu0 0.0
    %326 = vmatprep.subr.mxu0 0.0
    %327 = vmatpush1.msra.mxu0 0.0
    %328 = vmatprep.subr.mxu0 0.0
    %329 = vmatpush1.msra.mxu0 0.0
    %330 = vmatprep.subr.mxu0 0.0
    %331 = vmatpush1.msra.mxu0 0.0
    %332 = vmatprep.subr.mxu0 0.0
    %333 = vmatpush1.msra.mxu0 0.0
    %334 = vmatprep.subr.mxu0 0.0
    %335 = vmatpush1.msra.mxu0 0.0
    %336 = vmatprep.subr.mxu0 0.0
    %337 = vmatpush1.msra.mxu0 0.0
    %338 = vmatprep.subr.mxu0 0.0
    %339 = vmatpush1.msra.mxu0 0.0
    %340 = vmatprep.subr.mxu0 0.0
    %341 = vmatpush1.msra.mxu0 0.0
    %342 = vmatprep.subr.mxu0 0.0
    %343 = vmatpush1.msra.mxu0 0.0
    %344 = vmatprep.subr.mxu0 0.0
    %345 = vmatpush1.msra.mxu0 0.0
    %346 = vmatprep.subr.mxu0 0.0
    %347 = vmatpush1.msra.mxu0 0.0
    %348 = vmatprep.subr.mxu0 0.0
    %349 = vmatpush1.msra.mxu0 0.0
    %350 = vmatprep.subr.mxu0 0.0
    %351 = vmatpush1.msra.mxu0 0.0
    %352 = vmatprep.subr.mxu0 0.0
    %353 = vmatpush1.msra.mxu0 0.0
    %354 = vmatprep.subr.mxu0 0.0
    %355 = vmatpush1.msra.mxu0 0.0
    %356 = vmatprep.subr.mxu0 0.0
    %357 = vmatpush1.msra.mxu0 0.0
    %358 = vmatprep.subr.mxu0 0.0
    %359 = vmatpush1.msra.mxu0 0.0
    %360 = vmatprep.subr.mxu0 0.0
    %361 = vmatpush1.msra.mxu0 0.0
    %362 = vmatprep.subr.mxu0 0.0
    %363 = vmatpush1.msra.mxu0 0.0
    %364 = vmatprep.subr.mxu0 0.0
    %365 = vmatpush1.msra.mxu0 0.0
    %366 = vmatprep.subr.mxu0 0.0
    %367 = vmatpush1.msra.mxu0 0.0
    %368 = vmatprep.subr.mxu0 0.0
    %369 = vmatpush1.msra.mxu0 0.0
    %370 = vmatprep.mubr.f32.mxu0 0.0
    %371 = vmatmul.mubr.f32.gmra.mrb[0].mxu0 %v283
    %v372 = vpop.f32.mrb[0].mxu0
    %v373 = vadd.f32 %v279, %v372
    %v374 = vpop.f32.mrb[0].mxu0
    %375 = vmatprep.mubr.f32.mxu0 0.0
    %376 = vmatmul.mubr.f32.gmra.mrb[0].mxu0 %v286
    %v377 = vpop.f32.mrb[0].mxu0
    %v378 = vadd.f32 %v279, %v377
    %v379 = vpop.f32.mrb[0].mxu0
    %380 = vmatprep.mubr.f32.mxu0 0.0
    %381 = vmatmul.mubr.f32.gmra.mrb[0].mxu0 %v289
    %v382 = vpop.f32.mrb[0].mxu0
    %v383 = vadd.f32 %v279, %v382
    %v384 = vpop.f32.mrb[0].mxu0
    %385 = vmatprep.mubr.f32.mxu0 0.0
    %386 = vmatmul.mubr.f32.gmra.mrb[0].mxu0 %v292
    %v387 = vpop.f32.mrb[0].mxu0
    %v388 = vadd.f32 %v279, %v387
    %v389 = vpop.f32.mrb[0].mxu0
    %390 = vmatprep.mubr.f32.mxu0 0.0
    %391 = vmatmul.mubr.f32.gmra.mrb[0].mxu0 %v295
    %v392 = vpop.f32.mrb[0].mxu0
    %v393 = vadd.f32 %v279, %v392
    %v394 = vpop.f32.mrb[0].mxu0
    %395 = vmatprep.mubr.f32.mxu0 0.0
    %396 = vmatmul.mubr.f32.gmra.mrb[0].mxu0 %v298
    %v397 = vpop.f32.mrb[0].mxu0
    %v398 = vadd.f32 %v279, %v397
    %v399 = vpop.f32.mrb[0].mxu0
    %400 = vmatprep.mubr.f32.mxu0 0.0
    %401 = vmatmul.mubr.f32.gmra.mrb[0].mxu0 %v301
    %v402 = vpop.f32.mrb[0].mxu0
    %v403 = vadd.f32 %v279, %v402
    %v404 = vpop.f32.mrb[0].mxu0
    %405 = vmatprep.mubr.f32.mxu0 0.0
    %406 = vmatmul.mubr.f32.gmra.mrb[0].mxu0 %v304
    %v407 = vpop.f32.mrb[0].mxu0
    %v408 = vadd.f32 %v279, %v407
    %v409 = vpop.f32.mrb[0].mxu0
    %410 = vdwg.mxu0
    %v411 = vmax.f32 %v373, 0.0
    %v412 = vmax.f32 %v378, 0.0
    %v413 = vmax.f32 %v383, 0.0
    %v414 = vmax.f32 %v388, 0.0
    %v415 = vmax.f32 %v393, 0.0
    %v416 = vmax.f32 %v398, 0.0
    %v417 = vmax.f32 %v403, 0.0
    %v418 = vmax.f32 %v408, 0.0
    %v419 = vld [vmem:[%s4] sm:$0x1]
    %v421 = vlaneseq
    %v422 = vshrl.u32 %v421, 7
    %v423 = vsub.s32 0, %v422
    %v424 = vrot.slane %v419, %v423
    %v426 = vmul.f32 %v411, %v424
    %v427 = vmul.f32 %v412, %v424
    %v428 = vmul.f32 %v413, %v424
    %v429 = vmul.f32 %v414, %v424
    %v430 = vmul.f32 %v415, %v424
    %v431 = vmul.f32 %v416, %v424
    %v432 = vmul.f32 %v417, %v424
    %v433 = vmul.f32 %v418, %v424
    %v434 = vsel %vm281, %v426, 0.0
    %435 = vadd.xlane.f32.xlu0 %v434
    %v436 = vpop.xlane.xlu0 %435
    %v437 = vsel %vm281, %v427, 0.0
    %438 = vadd.xlane.f32.xlu0 %v437
    %v439 = vpop.xlane.xlu0 %438
    %v440 = vsel %vm281, %v428, 0.0
    %441 = vadd.xlane.f32.xlu0 %v440
    %v442 = vpop.xlane.xlu0 %441
    %v443 = vsel %vm281, %v429, 0.0
    %444 = vadd.xlane.f32.xlu0 %v443
    %v445 = vpop.xlane.xlu0 %444
    %v446 = vsel %vm281, %v430, 0.0
    %447 = vadd.xlane.f32.xlu0 %v446
    %v448 = vpop.xlane.xlu0 %447
    %v449 = vsel %vm281, %v431, 0.0
    %450 = vadd.xlane.f32.xlu0 %v449
    %v451 = vpop.xlane.xlu0 %450
    %v452 = vsel %vm281, %v432, 0.0
    %453 = vadd.xlane.f32.xlu0 %v452
    %v454 = vpop.xlane.xlu0 %453
    %v455 = vsel %vm281, %v433, 0.0
    %456 = vadd.xlane.f32.xlu0 %v455
    %v457 = vpop.xlane.xlu0 %456
    %s458 = sld [smem:[#allocation2]]
    %v459 = vstv %s458
    %v460 = vadd.f32 %v436, %v459
    %v461 = vadd.f32 %v439, %v459
    %v462 = vadd.f32 %v442, %v459
    %v463 = vadd.f32 %v445, %v459
    %v464 = vadd.f32 %v448, %v459
    %v465 = vadd.f32 %v451, %v459
    %v466 = vadd.f32 %v454, %v459
    %v467 = vadd.f32 %v457, %v459
    %v468 = vmax.f32 %v460, 0.0
    %v469 = vmax.f32 %v461, 0.0
    %v470 = vmax.f32 %v462, 0.0
    %v471 = vmax.f32 %v463, 0.0
    %v472 = vmax.f32 %v464, 0.0
    %v473 = vmax.f32 %v465, 0.0
    %v474 = vmax.f32 %v466, 0.0
    %v475 = vmax.f32 %v467, 0.0
    %v476 = vsub.f32 0.0, %v468
    %v477 = vsub.f32 0.0, %v469
    %v478 = vsub.f32 0.0, %v470
    %v479 = vsub.f32 0.0, %v471
    %v480 = vsub.f32 0.0, %v472
    %v481 = vsub.f32 0.0, %v473
    %v482 = vsub.f32 0.0, %v474
    %v483 = vsub.f32 0.0, %v475
    %v484 = vmul.f32 %v476, 1.442695
    %v485 = vpow.pop %v484
    %v486 = vmul.f32 %v477, 1.442695
    %v487 = vpow.pop %v486
    %v488 = vmul.f32 %v478, 1.442695
    %v489 = vpow.pop %v488
    %v490 = vmul.f32 %v479, 1.442695
    %v491 = vpow.pop %v490
    %v492 = vmul.f32 %v480, 1.442695
    %v493 = vpow.pop %v492
    %v494 = vmul.f32 %v481, 1.442695
    %v495 = vpow.pop %v494
    %v496 = vmul.f32 %v482, 1.442695
    %v497 = vpow.pop %v496
    %v498 = vmul.f32 %v483, 1.442695
    %v499 = vpow.pop %v498
    %v500 = vadd.f32 %v485, 1.0
    %v501 = vadd.f32 %v487, 1.0
    %v502 = vadd.f32 %v489, 1.0
    %v503 = vadd.f32 %v491, 1.0
    %v504 = vadd.f32 %v493, 1.0
    %v505 = vadd.f32 %v495, 1.0
    %v506 = vadd.f32 %v497, 1.0
    %v507 = vadd.f32 %v499, 1.0
    %v508 = vrcp.pop %v500
    %v509 = vmul.f32 1.0, %v508
    %v510 = vrcp.pop %v501
    %v511 = vmul.f32 1.0, %v510
    %v512 = vrcp.pop %v502
    %v513 = vmul.f32 1.0, %v512
    %v514 = vrcp.pop %v503
    %v515 = vmul.f32 1.0, %v514
    %v516 = vrcp.pop %v504
    %v517 = vmul.f32 1.0, %v516
    %v518 = vrcp.pop %v505
    %v519 = vmul.f32 1.0, %v518
    %v520 = vrcp.pop %v506
    %v521 = vmul.f32 1.0, %v520
    %v522 = vrcp.pop %v507
    %v523 = vmul.f32 1.0, %v522
    %v524 = vmul.f32 %v509, %v224
    %v525 = vmul.f32 %v511, %v229
    %v526 = vmul.f32 %v513, %v234
    %v527 = vmul.f32 %v515, %v239
    %v528 = vmul.f32 %v517, %v244
    %v529 = vmul.f32 %v519, %v249
    %v530 = vmul.f32 %v521, %v254
    %v531 = vmul.f32 %v523, %v259
    %v532 = vadd.f32 %v524, %v526
    %v533 = vadd.f32 %v525, %v527
    %v534 = vmax.f32 %v524, %v526
    %v535 = vmax.f32 %v525, %v527
    %v536 = vadd.f32 %v532, %v528
    %v537 = vadd.f32 %v533, %v529
    %v538 = vmax.f32 %v534, %v528
    %v539 = vmax.f32 %v535, %v529
    %v540 = vadd.f32 %v536, %v530
    %v541 = vadd.f32 %v537, %v531
    %v542 = vmax.f32 %v538, %v530
    %v543 = vmax.f32 %v539, %v531
    %v544 = vmul.f32 %v540, 0.25
    %v545 = vmul.f32 %v541, 0.25
    %v546 = vld [vmem:[%s6] sm:$0xff]
    %v547 = vld [vmem:[%s6 + $0x8] sm:$0xff]
    %v548 = vld [vmem:[%s6 + $0x10] sm:$0xff]
    %v549 = vld [vmem:[%s6 + $0x18] sm:$0xff]
    %v550 = vld [vmem:[%s7] sm:$0xff]
    %v551 = vld [vmem:[%s7 + $0x8] sm:$0xff]
    %v552 = vld [vmem:[%s7 + $0x10] sm:$0xff]
    %v553 = vld [vmem:[%s7 + $0x18] sm:$0xff]
    %v555 = vsel %vm281, %v542, 0
    %v558 = vsel %vm281, %v543, 0
    %560 = vmatprep.subr.mxu0 0.0
    %561 = vmatpush1.msra.mxu0 %v550
    %562 = vmatprep.subr.mxu0 0.0
    %563 = vmatpush1.msra.mxu0 %v551
    %564 = vmatprep.subr.mxu0 0.0
    %565 = vmatpush1.msra.mxu0 %v552
    %566 = vmatprep.subr.mxu0 0.0
    %567 = vmatpush1.msra.mxu0 %v553
    %568 = vmatprep.subr.mxu0 0.0
    %569 = vmatpush1.msra.mxu0 0.0
    %570 = vmatprep.subr.mxu0 0.0
    %571 = vmatpush1.msra.mxu0 0.0
    %572 = vmatprep.subr.mxu0 0.0
    %573 = vmatpush1.msra.mxu0 0.0
    %574 = vmatprep.subr.mxu0 0.0
    %575 = vmatpush1.msra.mxu0 0.0
    %576 = vmatprep.subr.mxu0 0.0
    %577 = vmatpush1.msra.mxu0 0.0
    %578 = vmatprep.subr.mxu0 0.0
    %579 = vmatpush1.msra.mxu0 0.0
    %580 = vmatprep.subr.mxu0 0.0
    %581 = vmatpush1.msra.mxu0 0.0
    %582 = vmatprep.subr.mxu0 0.0
    %583 = vmatpush1.msra.mxu0 0.0
    %584 = vmatprep.subr.mxu0 0.0
    %585 = vmatpush1.msra.mxu0 0.0
    %586 = vmatprep.subr.mxu0 0.0
    %587 = vmatpush1.msra.mxu0 0.0
    %588 = vmatprep.subr.mxu0 0.0
    %589 = vmatpush1.msra.mxu0 0.0
    %590 = vmatprep.subr.mxu0 0.0
    %591 = vmatpush1.msra.mxu0 0.0
    %592 = vmatprep.subr.mxu0 0.0
    %593 = vmatpush1.msra.mxu0 0.0
    %594 = vmatprep.subr.mxu0 0.0
    %595 = vmatpush1.msra.mxu0 0.0
    %596 = vmatprep.subr.mxu0 0.0
    %597 = vmatpush1.msra.mxu0 0.0
    %598 = vmatprep.subr.mxu0 0.0
    %599 = vmatpush1.msra.mxu0 0.0
    %600 = vmatprep.subr.mxu0 0.0
    %601 = vmatpush1.msra.mxu0 0.0
    %602 = vmatprep.subr.mxu0 0.0
    %603 = vmatpush1.msra.mxu0 0.0
    %604 = vmatprep.subr.mxu0 0.0
    %605 = vmatpush1.msra.mxu0 0.0
    %606 = vmatprep.subr.mxu0 0.0
    %607 = vmatpush1.msra.mxu0 0.0
    %608 = vmatprep.subr.mxu0 0.0
    %609 = vmatpush1.msra.mxu0 0.0
    %610 = vmatprep.subr.mxu0 0.0
    %611 = vmatpush1.msra.mxu0 0.0
    %612 = vmatprep.subr.mxu0 0.0
    %613 = vmatpush1.msra.mxu0 0.0
    %614 = vmatprep.subr.mxu0 0.0
    %615 = vmatpush1.msra.mxu0 0.0
    %616 = vmatprep.subr.mxu0 0.0
    %617 = vmatpush1.msra.mxu0 0.0
    %618 = vmatprep.subr.mxu0 0.0
    %619 = vmatpush1.msra.mxu0 0.0
    %620 = vmatprep.subr.mxu0 0.0
    %621 = vmatpush1.msra.mxu0 0.0
    %622 = vmatprep.subr.mxu0 0.0
    %623 = vmatpush1.msra.mxu0 0.0
    %624 = vmatprep.mubr.f32.mxu0 0.0
    %625 = vmatmul.mubr.f32.gmra.mrb[0].mxu0 %v555
    %v626 = vpop.f32.mrb[0].mxu0
    %v627 = vadd.f32 0.0, %v626
    %v628 = vpop.f32.mrb[0].mxu0
    %629 = vmatprep.mubr.f32.mxu0 0.0
    %630 = vmatmul.mubr.f32.gmra.mrb[0].mxu0 %v558
    %v631 = vpop.f32.mrb[0].mxu0
    %v632 = vadd.f32 0.0, %v631
    %v633 = vpop.f32.mrb[0].mxu0
    %634 = vdwg.mxu0
    %v636 = vsel %vm281, %v544, 0
    %v639 = vsel %vm281, %v545, 0
    %641 = vmatprep.subr.mxu0 0.0
    %642 = vmatpush1.msra.mxu0 %v546
    %643 = vmatprep.subr.mxu0 0.0
    %644 = vmatpush1.msra.mxu0 %v547
    %645 = vmatprep.subr.mxu0 0.0
    %646 = vmatpush1.msra.mxu0 %v548
    %647 = vmatprep.subr.mxu0 0.0
    %648 = vmatpush1.msra.mxu0 %v549
    %649 = vmatprep.subr.mxu0 0.0
    %650 = vmatpush1.msra.mxu0 0.0
    %651 = vmatprep.subr.mxu0 0.0
    %652 = vmatpush1.msra.mxu0 0.0
    %653 = vmatprep.subr.mxu0 0.0
    %654 = vmatpush1.msra.mxu0 0.0
    %655 = vmatprep.subr.mxu0 0.0
    %656 = vmatpush1.msra.mxu0 0.0
    %657 = vmatprep.subr.mxu0 0.0
    %658 = vmatpush1.msra.mxu0 0.0
    %659 = vmatprep.subr.mxu0 0.0
    %660 = vmatpush1.msra.mxu0 0.0
    %661 = vmatprep.subr.mxu0 0.0
    %662 = vmatpush1.msra.mxu0 0.0
    %663 = vmatprep.subr.mxu0 0.0
    %664 = vmatpush1.msra.mxu0 0.0
    %665 = vmatprep.subr.mxu0 0.0
    %666 = vmatpush1.msra.mxu0 0.0
    %667 = vmatprep.subr.mxu0 0.0
    %668 = vmatpush1.msra.mxu0 0.0
    %669 = vmatprep.subr.mxu0 0.0
    %670 = vmatpush1.msra.mxu0 0.0
    %671 = vmatprep.subr.mxu0 0.0
    %672 = vmatpush1.msra.mxu0 0.0
    %673 = vmatprep.subr.mxu0 0.0
    %674 = vmatpush1.msra.mxu0 0.0
    %675 = vmatprep.subr.mxu0 0.0
    %676 = vmatpush1.msra.mxu0 0.0
    %677 = vmatprep.subr.mxu0 0.0
    %678 = vmatpush1.msra.mxu0 0.0
    %679 = vmatprep.subr.mxu0 0.0
    %680 = vmatpush1.msra.mxu0 0.0
    %681 = vmatprep.subr.mxu0 0.0
    %682 = vmatpush1.msra.mxu0 0.0
    %683 = vmatprep.subr.mxu0 0.0
    %684 = vmatpush1.msra.mxu0 0.0
    %685 = vmatprep.subr.mxu0 0.0
    %686 = vmatpush1.msra.mxu0 0.0
    %687 = vmatprep.subr.mxu0 0.0
    %688 = vmatpush1.msra.mxu0 0.0
    %689 = vmatprep.subr.mxu0 0.0
    %690 = vmatpush1.msra.mxu0 0.0
    %691 = vmatprep.subr.mxu0 0.0
    %692 = vmatpush1.msra.mxu0 0.0
    %693 = vmatprep.subr.mxu0 0.0
    %694 = vmatpush1.msra.mxu0 0.0
    %695 = vmatprep.subr.mxu0 0.0
    %696 = vmatpush1.msra.mxu0 0.0
    %697 = vmatprep.subr.mxu0 0.0
    %698 = vmatpush1.msra.mxu0 0.0
    %699 = vmatprep.subr.mxu0 0.0
    %700 = vmatpush1.msra.mxu0 0.0
    %701 = vmatprep.subr.mxu0 0.0
    %702 = vmatpush1.msra.mxu0 0.0
    %703 = vmatprep.subr.mxu0 0.0
    %704 = vmatpush1.msra.mxu0 0.0
    %705 = vmatprep.mubr.f32.mxu0 0.0
    %706 = vmatmul.mubr.f32.gmra.mrb[0].mxu0 %v636
    %v707 = vpop.f32.mrb[0].mxu0
    %v708 = vadd.f32 %v627, %v707
    %v709 = vpop.f32.mrb[0].mxu0
    %710 = vmatprep.mubr.f32.mxu0 0.0
    %711 = vmatmul.mubr.f32.gmra.mrb[0].mxu0 %v639
    %v712 = vpop.f32.mrb[0].mxu0
    %v713 = vadd.f32 %v632, %v712
    %v714 = vpop.f32.mrb[0].mxu0
    %715 = vdwg.mxu0
    %v716 = vld [vmem:[%s8] sm:$0x1]
    %v718 = vlaneseq
    %v719 = vshrl.u32 %v718, 7
    %v720 = vsub.s32 0, %v719
    %v721 = vrot.slane %v716, %v720
    %v723 = vadd.f32 %v708, %v721
    %v724 = vadd.f32 %v713, %v721
    %v725 = vadd.f32 %v72, %v723
    %v726 = vadd.f32 %v73, %v724
    %v727 = vsel %vm281, %v725, 0.0
    %v728 = vsel %vm281, %v726, 0.0
    %v729 = vadd.f32 %v727, %v728
    %v730 = vrot.slane %v729, 4
    %v731 = vadd.f32 %v729, %v730
    %v732 = vrot.slane %v731, 2
    %v733 = vadd.f32 %v731, %v732
    %v734 = vrot.slane %v733, 1
    %v735 = vadd.f32 %v733, %v734
    %v736 = vrcp.pop 16.0
    %v737 = vmul.f32 %v735, %v736
    %v738 = vsub.f32 %v725, %v737
    %v739 = vsub.f32 %v726, %v737
    %v740 = vmul.f32 %v738, %v738
    %v741 = vmul.f32 %v739, %v739
    %v742 = vsel %vm281, %v740, 0.0
    %v743 = vsel %vm281, %v741, 0.0
    %v744 = vadd.f32 %v742, %v743
    %v745 = vrot.slane %v744, 4
    %v746 = vadd.f32 %v744, %v745
    %v747 = vrot.slane %v746, 2
    %v748 = vadd.f32 %v746, %v747
    %v749 = vrot.slane %v748, 1
    %v750 = vadd.f32 %v748, %v749
    %v751 = vmul.f32 %v750, %v736
    %v752 = vadd.f32 %v751, 1e-05
    %v753 = vrsqrt.pop %v752
    %v754 = vmul.f32 %v738, %v753
    %v755 = vmul.f32 %v739, %v753
    %v756 = vld [vmem:[%s13] sm:$0x1]
    %v758 = vlaneseq
    %v759 = vshrl.u32 %v758, 7
    %v760 = vsub.s32 0, %v759
    %v761 = vrot.slane %v756, %v760
    %v763 = vmul.f32 %v754, %v761
    %v764 = vmul.f32 %v755, %v761
    %v765 = vld [vmem:[%s14] sm:$0x1]
    %v767 = vlaneseq
    %v768 = vshrl.u32 %v767, 7
    %v769 = vsub.s32 0, %v768
    %v770 = vrot.slane %v765, %v769
    %v772 = vadd.f32 %v763, %v770
    %v773 = vadd.f32 %v764, %v770
    %v774 = vld [vmem:[%s9] sm:$0xff]
    %v775 = vld [vmem:[%s9 + $0x8] sm:$0xff]
    %v776 = vld [vmem:[%s9 + $0x10] sm:$0xff]
    %v777 = vld [vmem:[%s9 + $0x18] sm:$0xff]
    %v778 = vld [vmem:[%s10] sm:$0x1]
    %v780 = vlaneseq
    %v781 = vshrl.u32 %v780, 7
    %v782 = vsub.s32 0, %v781
    %v783 = vrot.slane %v778, %v782
    %v786 = vsel %vm281, %v772, 0
    %v789 = vsel %vm281, %v773, 0
    %791 = vmatprep.subr.mxu0 0.0
    %792 = vmatpush1.msra.mxu0 %v774
    %793 = vmatprep.subr.mxu0 0.0
    %794 = vmatpush1.msra.mxu0 %v775
    %795 = vmatprep.subr.mxu0 0.0
    %796 = vmatpush1.msra.mxu0 %v776
    %797 = vmatprep.subr.mxu0 0.0
    %798 = vmatpush1.msra.mxu0 %v777
    %799 = vmatprep.subr.mxu0 0.0
    %800 = vmatpush1.msra.mxu0 0.0
    %801 = vmatprep.subr.mxu0 0.0
    %802 = vmatpush1.msra.mxu0 0.0
    %803 = vmatprep.subr.mxu0 0.0
    %804 = vmatpush1.msra.mxu0 0.0
    %805 = vmatprep.subr.mxu0 0.0
    %806 = vmatpush1.msra.mxu0 0.0
    %807 = vmatprep.subr.mxu0 0.0
    %808 = vmatpush1.msra.mxu0 0.0
    %809 = vmatprep.subr.mxu0 0.0
    %810 = vmatpush1.msra.mxu0 0.0
    %811 = vmatprep.subr.mxu0 0.0
    %812 = vmatpush1.msra.mxu0 0.0
    %813 = vmatprep.subr.mxu0 0.0
    %814 = vmatpush1.msra.mxu0 0.0
    %815 = vmatprep.subr.mxu0 0.0
    %816 = vmatpush1.msra.mxu0 0.0
    %817 = vmatprep.subr.mxu0 0.0
    %818 = vmatpush1.msra.mxu0 0.0
    %819 = vmatprep.subr.mxu0 0.0
    %820 = vmatpush1.msra.mxu0 0.0
    %821 = vmatprep.subr.mxu0 0.0
    %822 = vmatpush1.msra.mxu0 0.0
    %823 = vmatprep.subr.mxu0 0.0
    %824 = vmatpush1.msra.mxu0 0.0
    %825 = vmatprep.subr.mxu0 0.0
    %826 = vmatpush1.msra.mxu0 0.0
    %827 = vmatprep.subr.mxu0 0.0
    %828 = vmatpush1.msra.mxu0 0.0
    %829 = vmatprep.subr.mxu0 0.0
    %830 = vmatpush1.msra.mxu0 0.0
    %831 = vmatprep.subr.mxu0 0.0
    %832 = vmatpush1.msra.mxu0 0.0
    %833 = vmatprep.subr.mxu0 0.0
    %834 = vmatpush1.msra.mxu0 0.0
    %835 = vmatprep.subr.mxu0 0.0
    %836 = vmatpush1.msra.mxu0 0.0
    %837 = vmatprep.subr.mxu0 0.0
    %838 = vmatpush1.msra.mxu0 0.0
    %839 = vmatprep.subr.mxu0 0.0
    %840 = vmatpush1.msra.mxu0 0.0
    %841 = vmatprep.subr.mxu0 0.0
    %842 = vmatpush1.msra.mxu0 0.0
    %843 = vmatprep.subr.mxu0 0.0
    %844 = vmatpush1.msra.mxu0 0.0
    %845 = vmatprep.subr.mxu0 0.0
    %846 = vmatpush1.msra.mxu0 0.0
    %847 = vmatprep.subr.mxu0 0.0
    %848 = vmatpush1.msra.mxu0 0.0
    %849 = vmatprep.subr.mxu0 0.0
    %850 = vmatpush1.msra.mxu0 0.0
    %851 = vmatprep.subr.mxu0 0.0
    %852 = vmatpush1.msra.mxu0 0.0
    %853 = vmatprep.subr.mxu0 0.0
    %854 = vmatpush1.msra.mxu0 0.0
    %855 = vmatprep.mubr.f32.mxu0 0.0
    %856 = vmatmul.mubr.f32.gmra.mrb[0].mxu0 %v786
    %v857 = vpop.f32.mrb[0].mxu0
    %v858 = vadd.f32 %v783, %v857
    %v859 = vpop.f32.mrb[0].mxu0
    %860 = vmatprep.mubr.f32.mxu0 0.0
    %861 = vmatmul.mubr.f32.gmra.mrb[0].mxu0 %v789
    %v862 = vpop.f32.mrb[0].mxu0
    %v863 = vadd.f32 %v783, %v862
    %v864 = vpop.f32.mrb[0].mxu0
    %865 = vdwg.mxu0
    %v866 = vmax.f32 %v858, 0.0
    %v867 = vmax.f32 %v863, 0.0
    %v868 = vld [vmem:[%s11] sm:$0xff]
    %v869 = vld [vmem:[%s11 + $0x8] sm:$0xff]
    %v870 = vld [vmem:[%s11 + $0x10] sm:$0xff]
    %v871 = vld [vmem:[%s11 + $0x18] sm:$0xff]
    %v872 = vld [vmem:[%s11 + $0x20] sm:$0xff]
    %v873 = vld [vmem:[%s11 + $0x28] sm:$0xff]
    %v874 = vld [vmem:[%s11 + $0x30] sm:$0xff]
    %v875 = vld [vmem:[%s11 + $0x38] sm:$0xff]
    %v876 = vld [vmem:[%s12] sm:$0x1]
    %v878 = vlaneseq
    %v879 = vshrl.u32 %v878, 7
    %v880 = vsub.s32 0, %v879
    %v881 = vrot.slane %v876, %v880
    %vm883 = vcmask 523264
    %v885 = vsel %vm883, %v866, 0
    %v888 = vsel %vm883, %v867, 0
    %890 = vmatprep.subr.mxu0 0.0
    %891 = vmatpush1.msra.mxu0 %v868
    %892 = vmatprep.subr.mxu0 0.0
    %893 = vmatpush1.msra.mxu0 %v869
    %894 = vmatprep.subr.mxu0 0.0
    %895 = vmatpush1.msra.mxu0 %v870
    %896 = vmatprep.subr.mxu0 0.0
    %897 = vmatpush1.msra.mxu0 %v871
    %898 = vmatprep.subr.mxu0 0.0
    %899 = vmatpush1.msra.mxu0 %v872
    %900 = vmatprep.subr.mxu0 0.0
    %901 = vmatpush1.msra.mxu0 %v873
    %902 = vmatprep.subr.mxu0 0.0
    %903 = vmatpush1.msra.mxu0 %v874
    %904 = vmatprep.subr.mxu0 0.0
    %905 = vmatpush1.msra.mxu0 %v875
    %906 = vmatprep.subr.mxu0 0.0
    %907 = vmatpush1.msra.mxu0 0.0
    %908 = vmatprep.subr.mxu0 0.0
    %909 = vmatpush1.msra.mxu0 0.0
    %910 = vmatprep.subr.mxu0 0.0
    %911 = vmatpush1.msra.mxu0 0.0
    %912 = vmatprep.subr.mxu0 0.0
    %913 = vmatpush1.msra.mxu0 0.0
    %914 = vmatprep.subr.mxu0 0.0
    %915 = vmatpush1.msra.mxu0 0.0
    %916 = vmatprep.subr.mxu0 0.0
    %917 = vmatpush1.msra.mxu0 0.0
    %918 = vmatprep.subr.mxu0 0.0
    %919 = vmatpush1.msra.mxu0 0.0
    %920 = vmatprep.subr.mxu0 0.0
    %921 = vmatpush1.msra.mxu0 0.0
    %922 = vmatprep.subr.mxu0 0.0
    %923 = vmatpush1.msra.mxu0 0.0
    %924 = vmatprep.subr.mxu0 0.0
    %925 = vmatpush1.msra.mxu0 0.0
    %926 = vmatprep.subr.mxu0 0.0
    %927 = vmatpush1.msra.mxu0 0.0
    %928 = vmatprep.subr.mxu0 0.0
    %929 = vmatpush1.msra.mxu0 0.0
    %930 = vmatprep.subr.mxu0 0.0
    %931 = vmatpush1.msra.mxu0 0.0
    %932 = vmatprep.subr.mxu0 0.0
    %933 = vmatpush1.msra.mxu0 0.0
    %934 = vmatprep.subr.mxu0 0.0
    %935 = vmatpush1.msra.mxu0 0.0
    %936 = vmatprep.subr.mxu0 0.0
    %937 = vmatpush1.msra.mxu0 0.0
    %938 = vmatprep.subr.mxu0 0.0
    %939 = vmatpush1.msra.mxu0 0.0
    %940 = vmatprep.subr.mxu0 0.0
    %941 = vmatpush1.msra.mxu0 0.0
    %942 = vmatprep.subr.mxu0 0.0
    %943 = vmatpush1.msra.mxu0 0.0
    %944 = vmatprep.subr.mxu0 0.0
    %945 = vmatpush1.msra.mxu0 0.0
    %946 = vmatprep.subr.mxu0 0.0
    %947 = vmatpush1.msra.mxu0 0.0
    %948 = vmatprep.subr.mxu0 0.0
    %949 = vmatpush1.msra.mxu0 0.0
    %950 = vmatprep.subr.mxu0 0.0
    %951 = vmatpush1.msra.mxu0 0.0
    %952 = vmatprep.subr.mxu0 0.0
    %953 = vmatpush1.msra.mxu0 0.0
    %954 = vmatprep.mubr.f32.mxu0 0.0
    %955 = vmatmul.mubr.f32.gmra.mrb[0].mxu0 %v885
    %v956 = vpop.f32.mrb[0].mxu0
    %v957 = vadd.f32 %v881, %v956
    %v958 = vpop.f32.mrb[0].mxu0
    %959 = vmatprep.mubr.f32.mxu0 0.0
    %960 = vmatmul.mubr.f32.gmra.mrb[0].mxu0 %v888
    %v961 = vpop.f32.mrb[0].mxu0
    %v962 = vadd.f32 %v881, %v961
    %v963 = vpop.f32.mrb[0].mxu0
    %964 = vdwg.mxu0
    %v965 = vadd.f32 %v772, %v957
    %v966 = vadd.f32 %v773, %v962
    %v967 = vsel %vm281, %v965, 0.0
    %v968 = vsel %vm281, %v966, 0.0
    %v969 = vadd.f32 %v967, %v968
    %v970 = vrot.slane %v969, 4
    %v971 = vadd.f32 %v969, %v970
    %v972 = vrot.slane %v971, 2
    %v973 = vadd.f32 %v971, %v972
    %v974 = vrot.slane %v973, 1
    %v975 = vadd.f32 %v973, %v974
    %v976 = vmul.f32 %v975, %v736
    %v977 = vsub.f32 %v965, %v976
    %v978 = vsub.f32 %v966, %v976
    %v979 = vmul.f32 %v977, %v977
    %v980 = vmul.f32 %v978, %v978
    %v981 = vsel %vm281, %v979, 0.0
    %v982 = vsel %vm281, %v980, 0.0
    %v983 = vadd.f32 %v981, %v982
    %v984 = vrot.slane %v983, 4
    %v985 = vadd.f32 %v983, %v984
    %v986 = vrot.slane %v985, 2
    %v987 = vadd.f32 %v985, %v986
    %v988 = vrot.slane %v987, 1
    %v989 = vadd.f32 %v987, %v988
    %v990 = vmul.f32 %v989, %v736
    %v991 = vadd.f32 %v990, 1e-05
    %v992 = vrsqrt.pop %v991
    %v993 = vmul.f32 %v977, %v992
    %v994 = vmul.f32 %v978, %v992
    %v995 = vld [vmem:[%s15] sm:$0x1]
    %v997 = vlaneseq
    %v998 = vshrl.u32 %v997, 7
    %v999 = vsub.s32 0, %v998
    %v1000 = vrot.slane %v995, %v999
    %v1002 = vmul.f32 %v993, %v1000
    %v1003 = vmul.f32 %v994, %v1000
    %v1004 = vld [vmem:[%s16] sm:$0x1]
    %v1006 = vlaneseq
    %v1007 = vshrl.u32 %v1006, 7
    %v1008 = vsub.s32 0, %v1007
    %v1009 = vrot.slane %v1004, %v1008
    %v1011 = vadd.f32 %v1002, %v1009
    %v1012 = vadd.f32 %v1003, %v1009
    %1013 = vst.msk [vmem:[#allocation6] sm:$0xff] %vm281, %v1011
    %1014 = vst.msk [vmem:[#allocation6 + $0x8] sm:$0xff] %vm281, %v1012
    // Predicated region
    $region74: #{mlp_difs_forward.1} parent=1 // pred_check
      _
    $region75: #{mlp_difs_forward.1} parent=1 // pred_check_branch
      %1016 = sbr.rel (0) target = $region77
    $region76: #{mlp_difs_forward.1} parent=1 // pred_region
      %s1018 = ssub.s32 256, 256
      %1019 = vsyncadd [#allocation5], %s1018
      %s1020 = sshll.u32 [#allocation6], 4
      %s1021 = int_to_ptr.vmem [resolvable:$true] %s1020
      %1026 = dma.vmem_to_hbm [thread:$0]  %s1021, 256, %s17, [#allocation5], 128, 128, 8
    $region77: #{mlp_difs_forward.1} parent=1 // pred_fallthru
      _
    // Predicated region
    $region78: #{mlp_difs_forward.1} parent=1 // pred_check
      _
    $region79: #{mlp_difs_forward.1} parent=1 // pred_check_branch
      %1028 = sbr.rel (0) target = $region81
    $region80: #{mlp_difs_forward.1} parent=1 // pred_region
      %1029 = dma.done [#allocation5], 256
    $region81: #{mlp_difs_forward.1} parent=1 // pred_fallthru
      _
    %1030 = vsyncpa [#allocation4], 1
    %1031 = vsyncpa [#allocation5], 1

</llo_original>
